<compile_context>
chip_gen: v7x
topology: tpu7x:2x2x1
jax: 0.10.0
libtpu: 0.0.40
codegen_flags: <defaults>
</compile_context>

<pallas_src>
import functools

import jax
import jax.numpy as jnp
from jax import lax
from jax.experimental import pallas as pl
from jax.experimental.pallas import tpu as pltpu

_NEG_LARGE = -1e30  # column-padding value (exp(pad - max) == 0, never the row max)


def _round_up(x, a):
    return (x + a - 1) // a * a


def _choose_tile(size, align, target):
    """Pick (tile, padded_size): tile is a multiple of `align`, padded_size of tile.

    Prefers a tile that divides the align-rounded size (no wasted HBM traffic);
    falls back to the full target tile with bounded padding when only tiny divisors
    exist (keeps per-grid-step DMAs large enough to hide the ~0.35us step overhead).
    """
    target = max(align, (target // align) * align)
    padded = _round_up(size, align)
    if padded <= target:
        return padded, padded
    t = target
    while padded % t:
        t -= align
    if t * 4 >= target:                 # reasonably large divisor found -> no padding
        return t, padded
    return target, _round_up(size, target)


# --------------------------------------------------------------------------
# Phase 1: per-row cross-entropy losses via online logsumexp over C tiles.
# --------------------------------------------------------------------------
def _ce_loss_kernel(logits_ref, labels_ref, loss_ref, m_sc, s_sc, p_sc):
    ci = pl.program_id(1)

    @pl.when(ci == 0)
    def _():
        m_sc[...] = jnp.full_like(m_sc, -jnp.inf)
        s_sc[...] = jnp.zeros_like(s_sc)
        p_sc[...] = jnp.zeros_like(p_sc)

    x = logits_ref[...].astype(jnp.float32)           # (tn, tc) native dtype -> f32
    lab = labels_ref[...]                             # (tn, 1) int32
    tn, tc = x.shape

    # Label gather via iota-compare, accumulated alongside the streaming pass.
    col = lax.broadcasted_iota(jnp.int32, (tn, tc), 1) + ci * tc
    p_sc[...] += jnp.sum(jnp.where(col == lab, x, 0.0), axis=-1, keepdims=True)

    # Online (flash-style) logsumexp accumulation.
    tile_max = jnp.max(x, axis=-1, keepdims=True)
    m_new = jnp.maximum(m_sc[...], tile_max)
    s_sc[...] = s_sc[...] * jnp.exp(m_sc[...] - m_new) + jnp.sum(
        jnp.exp(x - m_new), axis=-1, keepdims=True)
    m_sc[...] = m_new

    @pl.when(ci == pl.num_programs(1) - 1)
    def _():
        loss_ref[...] = m_sc[...] + jnp.log(s_sc[...]) - p_sc[...]


# --------------------------------------------------------------------------
# Phase 2: exact top-m mean (or max for k == 0) on the lane-dense loss slab.
# --------------------------------------------------------------------------
def _topk_mean_kernel(loss_ref, out_ref, *, n, m, k_is_zero):
    vals = loss_ref[...]                              # (r, 128) f32, lane-dense
    r, l = vals.shape
    idx = (lax.broadcasted_iota(jnp.int32, (r, l), 0) * l
           + lax.broadcasted_iota(jnp.int32, (r, l), 1))
    valid = idx < n

    if k_is_zero:
        out_ref[0, 0] = jnp.max(jnp.where(valid, vals, -jnp.inf))
        return

    # CE losses are >= 0, so their f32 bit patterns (as int32) order like the floats.
    # Clamp to >= 0 to stay monotone even if rounding produced a ~ -1e-7 loss.
    bits = jnp.maximum(pltpu.bitcast(vals, jnp.int32), 0)
    key = jnp.where(valid, bits, jnp.int32(-1))       # padding can never win

    # Binary search (exact) for the m-th largest key: largest v with count(key >= v) >= m.
    def body(_, carry):
        lo, hi = carry
        mid = lo + (hi - lo + 1) // 2
        cnt = jnp.sum((key >= mid).astype(jnp.int32))
        take = cnt >= m
        return jnp.where(take, mid, lo), jnp.where(take, hi, mid - 1)

    lo, _ = lax.fori_loop(0, 32, body, (jnp.int32(0), jnp.int32(0x7F800000)))
    kth = lo                                          # bit pattern of the m-th largest loss

    gt = key > kth
    cnt_gt = jnp.sum(gt.astype(jnp.int32))            # strictly above threshold (< m)
    sum_gt = jnp.sum(jnp.where(gt, vals, 0.0))
    t = jnp.max(jnp.where(key == kth, vals, -jnp.inf))  # the threshold value itself
    out_ref[0, 0] = (sum_gt + (m - cnt_gt).astype(jnp.float32) * t) / jnp.float32(m)


# --------------------------------------------------------------------------
# Wrapper
# --------------------------------------------------------------------------
def topk_cross_entropy_loss(outputs, labels, k, *, tile_n=512, tile_c=2048):
    """outputs: (N, C) float (any dtype), labels: (N,) int -> scalar f32 loss."""
    n, c = outputs.shape

    k_is_zero = (k == 0)
    if k_is_zero:
        m = 0
    else:
        assert k > 0 and k <= 1, "invalid k"
        m = int(n * k)
        assert m >= 1, "top-k slice is empty (mean of empty is NaN in torch)"

    tn, n_pad = _choose_tile(n, 8, tile_n)
    tc, c_pad = _choose_tile(c, 128, tile_c)

    # Keep logits in their native dtype (no f32 upcast in HBM); pad for tiling.
    x = outputs
    if c_pad != c:
        x = jnp.pad(x, ((0, 0), (0, c_pad - c)), constant_values=_NEG_LARGE)
    if n_pad != n:
        x = jnp.pad(x, ((0, n_pad - n), (0, 0)))
    labels2 = labels.reshape(n, 1).astype(jnp.int32)
    if n_pad != n:
        labels2 = jnp.pad(labels2, ((0, n_pad - n), (0, 0)))

    losses = pl.pallas_call(
        _ce_loss_kernel,
        out_shape=jax.ShapeDtypeStruct((n_pad, 1), jnp.float32),
        grid_spec=pltpu.PrefetchScalarGridSpec(
            num_scalar_prefetch=0,
            grid=(n_pad // tn, c_pad // tc),
            in_specs=[
                pl.BlockSpec((tn, tc), lambda i, j: (i, j)),   # logits tile
                pl.BlockSpec((tn, 1), lambda i, j: (i, 0)),    # labels (resident over C)
            ],
            out_specs=pl.BlockSpec((tn, 1), lambda i, j: (i, 0)),
            scratch_shapes=[pltpu.VMEM((tn, 1), jnp.float32)] * 3,
        ),
        compiler_params=pltpu.CompilerParams(
            dimension_semantics=("parallel", "arbitrary")),
    )(x, labels2)

    # Re-present the (n_pad,) losses lane-dense for the selection kernel (tiny reshape).
    n2 = _round_up(n_pad, 1024)
    flat = losses.reshape(n_pad)
    if n2 != n_pad:
        flat = jnp.pad(flat, (0, n2 - n_pad))
    dense = flat.reshape(n2 // 128, 128)

    out = pl.pallas_call(
        functools.partial(_topk_mean_kernel, n=n, m=m, k_is_zero=k_is_zero),
        out_shape=jax.ShapeDtypeStruct((1, 1), jnp.float32),
        in_specs=[pl.BlockSpec(memory_space=pltpu.MemorySpace.VMEM)],
        out_specs=pl.BlockSpec(memory_space=pltpu.MemorySpace.SMEM),
    )(dense)
    return out[0, 0]


def _reference(outputs, labels, k):
    x = outputs.astype(jnp.float32)
    lse = jax.nn.logsumexp(x, axis=-1)
    picked = jnp.take_along_axis(x, labels[:, None].astype(jnp.int32), axis=-1)[:, 0]
    loss = jnp.sort(lse - picked)[::-1]
    if k == 0:
        return loss[0]
    return jnp.mean(loss[: int(loss.shape[0] * k)])


if __name__ == "__main__":
    key = jax.random.PRNGKey(0)
    configs = [
        dict(n=8,  c=32,  dtype=jnp.float32,  ks=(0.5, 0),  tiles={}),
        dict(n=20, c=200, dtype=jnp.bfloat16, ks=(0.3, 0),  tiles={}),                          # padding path, native bf16
        dict(n=48, c=640, dtype=jnp.float32,  ks=(0.25, 0), tiles=dict(tile_n=16, tile_c=256)),  # multi-tile grid
    ]
    for cfg in configs:
        key, k_out, k_lab = jax.random.split(key, 3)
        outputs = jax.random.normal(k_out, (cfg["n"], cfg["c"]), dtype=jnp.float32)
        outputs = outputs.astype(cfg["dtype"])
        labels = jax.random.randint(k_lab, (cfg["n"],), 0, cfg["c"], dtype=jnp.int32)
        for k_frac in cfg["ks"]:
            got = jax.block_until_ready(
                topk_cross_entropy_loss(outputs, labels, k_frac, **cfg["tiles"]))
            want = _reference(outputs, labels, k_frac)
            assert jnp.allclose(got, want, rtol=1e-5, atol=1e-5), (cfg, k_frac, got, want)
    print("KERNEL_OK")
</pallas_src>

<mosaic_0001>
module attributes {stable_mosaic.version = 11 : i64} {
  func.func @_ce_loss_kernel(%arg0: i32, %arg1: i32, %arg2: memref<8x128xf32, #tpu.memory_space<vmem>>, %arg3: memref<8x1xi32, #tpu.memory_space<vmem>>, %arg4: memref<8x1xf32, #tpu.memory_space<vmem>>, %arg5: memref<8x1xf32, #tpu.memory_space<vmem>>, %arg6: memref<8x1xf32, #tpu.memory_space<vmem>>, %arg7: memref<8x1xf32, #tpu.memory_space<vmem>>) attributes {dimension_semantics = [#tpu.dimension_semantics<parallel>, #tpu.dimension_semantics<arbitrary>], iteration_bounds = array<i64: 1, 1>, scalar_prefetch = 0 : i64, scratch_operands = 3 : i64, tpu.core_type = #tpu.core_type<tc>, window_params = [{transform_indices = @transform_0, window_bounds = array<i64: 8, 128>}, {transform_indices = @transform_1, window_bounds = array<i64: 8, 1>}, {transform_indices = @transform_2, window_bounds = array<i64: 8, 1>}]} {
    %c0_i32 = arith.constant 0 : i32
    %0 = arith.cmpi eq, %arg1, %c0_i32 : i32
    %1 = arith.extui %0 : i1 to i32
    %c0_i32_0 = arith.constant 0 : i32
    %2 = arith.cmpi ne, %1, %c0_i32_0 : i32
    scf.if %2 {
      %cst_23 = arith.constant 0xFF800000 : f32
      %38 = vector.broadcast %cst_23 : f32 to vector<8x1xf32>
      %c0_24 = arith.constant 0 : index
      %c0_25 = arith.constant 0 : index
      %39 = vector.load %arg5[%c0_24, %c0_25] : memref<8x1xf32, #tpu.memory_space<vmem>>, vector<8x1xf32>
      tpu.vector_store %arg5[%c0_24, %c0_25], %38 {strides = array<i32>} : memref<8x1xf32, #tpu.memory_space<vmem>>, vector<8x1xf32>,
      %cst_26 = arith.constant 0.000000e+00 : f32
      %40 = vector.broadcast %cst_26 : f32 to vector<8x1xf32>
      %c0_27 = arith.constant 0 : index
      %c0_28 = arith.constant 0 : index
      %41 = vector.load %arg6[%c0_27, %c0_28] : memref<8x1xf32, #tpu.memory_space<vmem>>, vector<8x1xf32>
      tpu.vector_store %arg6[%c0_27, %c0_28], %40 {strides = array<i32>} : memref<8x1xf32, #tpu.memory_space<vmem>>, vector<8x1xf32>,
      %cst_29 = arith.constant 0.000000e+00 : f32
      %42 = vector.broadcast %cst_29 : f32 to vector<8x1xf32>
      %c0_30 = arith.constant 0 : index
      %c0_31 = arith.constant 0 : index
      %43 = vector.load %arg7[%c0_30, %c0_31] : memref<8x1xf32, #tpu.memory_space<vmem>>, vector<8x1xf32>
      tpu.vector_store %arg7[%c0_30, %c0_31], %42 {strides = array<i32>} : memref<8x1xf32, #tpu.memory_space<vmem>>, vector<8x1xf32>,
    } else {
    }
    %c0 = arith.constant 0 : index
    %c0_1 = arith.constant 0 : index
    %3 = vector.load %arg2[%c0, %c0_1] : memref<8x128xf32, #tpu.memory_space<vmem>>, vector<8x128xf32>
    %c0_2 = arith.constant 0 : index
    %c0_3 = arith.constant 0 : index
    %4 = vector.load %arg3[%c0_2, %c0_3] : memref<8x1xi32, #tpu.memory_space<vmem>>, vector<8x1xi32>
    %5 = tpu.iota {dimensions = array<i32: 1>} : vector<8x128xi32>
    %c128_i32 = arith.constant 128 : i32
    %6 = arith.muli %arg1, %c128_i32 : i32
    %7 = vector.broadcast %6 : i32 to vector<8x128xi32>
    %8 = arith.addi %5, %7 : vector<8x128xi32>
    %c0_4 = arith.constant 0 : index
    %c0_5 = arith.constant 0 : index
    %9 = vector.load %arg7[%c0_4, %c0_5] : memref<8x1xf32, #tpu.memory_space<vmem>>, vector<8x1xf32>
    %10 = vector.broadcast %4 : vector<8x1xi32> to vector<8x128xi32>
    %11 = arith.cmpi eq, %8, %10 : vector<8x128xi32>
    %cst = arith.constant 0.000000e+00 : f32
    %12 = vector.broadcast %cst : f32 to vector<8x128xf32>
    %13 = arith.select %11, %3, %12 : vector<8x128xi1>, vector<8x128xf32>
    %cst_6 = arith.constant dense<0.000000e+00> : vector<8xf32>
    %14 = vector.multi_reduction <add>, %13, %cst_6 [1] : vector<8x128xf32> to vector<8xf32>
    %15 = vector.shape_cast %14 : vector<8xf32> to vector<8x1xf32>
    %16 = arith.addf %9, %15 : vector<8x1xf32>
    %c0_7 = arith.constant 0 : index
    %c0_8 = arith.constant 0 : index
    %17 = vector.load %arg7[%c0_7, %c0_8] : memref<8x1xf32, #tpu.memory_space<vmem>>, vector<8x1xf32>
    tpu.vector_store %arg7[%c0_7, %c0_8], %16 {strides = array<i32>} : memref<8x1xf32, #tpu.memory_space<vmem>>, vector<8x1xf32>,
    %cst_9 = arith.constant dense<0xFF800000> : vector<8xf32>
    %18 = vector.multi_reduction <maximumf>, %3, %cst_9 [1] : vector<8x128xf32> to vector<8xf32>
    %19 = vector.shape_cast %18 : vector<8xf32> to vector<8x1xf32>
    %c0_10 = arith.constant 0 : index
    %c0_11 = arith.constant 0 : index
    %20 = vector.load %arg5[%c0_10, %c0_11] : memref<8x1xf32, #tpu.memory_space<vmem>>, vector<8x1xf32>
    %21 = arith.maximumf %20, %19 : vector<8x1xf32>
    %c0_12 = arith.constant 0 : index
    %c0_13 = arith.constant 0 : index
    %22 = vector.load %arg6[%c0_12, %c0_13] : memref<8x1xf32, #tpu.memory_space<vmem>>, vector<8x1xf32>
    %c0_14 = arith.constant 0 : index
    %c0_15 = arith.constant 0 : index
    %23 = vector.load %arg5[%c0_14, %c0_15] : memref<8x1xf32, #tpu.memory_space<vmem>>, vector<8x1xf32>
    %24 = arith.subf %23, %21 : vector<8x1xf32>
    %25 = math.exp %24 : vector<8x1xf32>
    %26 = arith.mulf %22, %25 : vector<8x1xf32>
    %27 = vector.broadcast %21 : vector<8x1xf32> to vector<8x128xf32>
    %28 = arith.subf %3, %27 : vector<8x128xf32>
    %29 = math.exp %28 : vector<8x128xf32>
    %cst_16 = arith.constant dense<0.000000e+00> : vector<8xf32>
    %30 = vector.multi_reduction <add>, %29, %cst_16 [1] : vector<8x128xf32> to vector<8xf32>
    %31 = vector.shape_cast %30 : vector<8xf32> to vector<8x1xf32>
    %32 = arith.addf %26, %31 : vector<8x1xf32>
    %c0_17 = arith.constant 0 : index
    %c0_18 = arith.constant 0 : index
    %33 = vector.load %arg6[%c0_17, %c0_18] : memref<8x1xf32, #tpu.memory_space<vmem>>, vector<8x1xf32>
    tpu.vector_store %arg6[%c0_17, %c0_18], %32 {strides = array<i32>} : memref<8x1xf32, #tpu.memory_space<vmem>>, vector<8x1xf32>,
    %c0_19 = arith.constant 0 : index
    %c0_20 = arith.constant 0 : index
    %34 = vector.load %arg5[%c0_19, %c0_20] : memref<8x1xf32, #tpu.memory_space<vmem>>, vector<8x1xf32>
    tpu.vector_store %arg5[%c0_19, %c0_20], %21 {strides = array<i32>} : memref<8x1xf32, #tpu.memory_space<vmem>>, vector<8x1xf32>,
    %c0_i32_21 = arith.constant 0 : i32
    %35 = arith.cmpi eq, %arg1, %c0_i32_21 : i32
    %36 = arith.extui %35 : i1 to i32
    %c0_i32_22 = arith.constant 0 : i32
    %37 = arith.cmpi ne, %36, %c0_i32_22 : i32
    scf.if %37 {
      %c0_23 = arith.constant 0 : index
      %c0_24 = arith.constant 0 : index
      %38 = vector.load %arg5[%c0_23, %c0_24] : memref<8x1xf32, #tpu.memory_space<vmem>>, vector<8x1xf32>
      %c0_25 = arith.constant 0 : index
      %c0_26 = arith.constant 0 : index
      %39 = vector.load %arg6[%c0_25, %c0_26] : memref<8x1xf32, #tpu.memory_space<vmem>>, vector<8x1xf32>
      %40 = math.log %39 : vector<8x1xf32>
      %41 = arith.addf %38, %40 : vector<8x1xf32>
      %c0_27 = arith.constant 0 : index
      %c0_28 = arith.constant 0 : index
      %42 = vector.load %arg7[%c0_27, %c0_28] : memref<8x1xf32, #tpu.memory_space<vmem>>, vector<8x1xf32>
      %43 = arith.subf %41, %42 : vector<8x1xf32>
      %c0_29 = arith.constant 0 : index
      %c0_30 = arith.constant 0 : index
      %44 = vector.load %arg4[%c0_29, %c0_30] : memref<8x1xf32, #tpu.memory_space<vmem>>, vector<8x1xf32>
      tpu.vector_store %arg4[%c0_29, %c0_30], %43 {strides = array<i32>} : memref<8x1xf32, #tpu.memory_space<vmem>>, vector<8x1xf32>,
    } else {
    }
    return
  }
  func.func @transform_0(%arg0: i32, %arg1: i32) -> (i32, i32) {
    %c0_i32 = arith.constant 0 : i32
    return %arg0, %arg1 : i32, i32
  }
  func.func @transform_1(%arg0: i32, %arg1: i32) -> (i32, i32) {
    %c0_i32 = arith.constant 0 : i32
    %c0_i32_0 = arith.constant 0 : i32
    return %arg0, %c0_i32 : i32, i32
  }
  func.func @transform_2(%arg0: i32, %arg1: i32) -> (i32, i32) {
    %c0_i32 = arith.constant 0 : i32
    %c0_i32_0 = arith.constant 0 : i32
    return %arg0, %c0_i32 : i32, i32
  }
}

</mosaic_0001>

<llo_original>
// kernel: tpu_custom_call.1
$region0: #{tpu_custom_call.1}
  #allocation0 [shape = 'u32[]', space=smem, size = 0x4, offset = 0x4, fixed_abs, tag = 'smem constant byte address 0x4 - core index']
  #allocation1 [shape = 'u32[144,128]{1,0:T(1,128)}', space=vmem, size = 0x12000, scoped, tag = 'internal scratch']
  #allocation2 [shape = 'f32[8,1]{1,0:T(8,128)}', space=vmem, size = 0x1000, scoped, tag = 'scratch operand']
  #allocation3 [shape = 'f32[8,1]{1,0:T(8,128)}', space=vmem, size = 0x1000, scoped, tag = 'scratch operand']
  #allocation4 [shape = 'f32[8,1]{1,0:T(8,128)}', space=vmem, size = 0x1000, scoped, tag = 'scratch operand']
  %s0 = inlined_call_operand.vmem [shape: f32[8,128], index: 0, kind: input, shape index: {}]
  %s1 = inlined_call_operand.vmem [shape: s32[8,1], index: 1, kind: input, shape index: {}]
  %s2 = inlined_call_operand.vmem [shape: f32[8,1], index: 2, kind: output, shape index: {}]
  %s3 = sld [smem:[#allocation0]]
  $region26: #{tpu_custom_call.1} parent=0
    _
  %s5 = ssub.s32 1, %s3
  %s6 = scalar_select 0, %s5, %s3
  // Predicated region
  $region2: #{tpu_custom_call.1} parent=0 // pred_check
    _
  $region3: #{tpu_custom_call.1} parent=0 // pred_check_branch
    %8 = sbr.rel (0) target = $region5
  $region4: #{tpu_custom_call.1} parent=0 // pred_region
    _
  $region5: #{tpu_custom_call.1} parent=0 // pred_fallthru
    _
  // Predicated region
  $region6: #{tpu_custom_call.1} parent=0 // pred_check
    _
  $region7: #{tpu_custom_call.1} parent=0 // pred_check_branch
    %10 = sbr.rel (0) target = $region9
  $region8: #{tpu_custom_call.1} parent=0 // pred_region
    _
  $region9: #{tpu_custom_call.1} parent=0 // pred_fallthru
    _
  %p11 = scmp.eq.s32.totalorder 0, 0
  // Predicated region
  $region10: #{tpu_custom_call.1} parent=0 // pred_check
    %p12 = pneg %p11
  $region11: #{tpu_custom_call.1} parent=0 // pred_check_branch
    %14 = sbr.rel (%p12) target = $region13
  $region12: #{tpu_custom_call.1} parent=0 // pred_region
    %vm15 = vcmask 7168
    %16 = vst.msk [vmem:[#allocation2] sm:$0xff] %vm15, -inf
    %17 = vst.msk [vmem:[#allocation3] sm:$0xff] %vm15, 0.0
    %18 = vst.msk [vmem:[#allocation4] sm:$0xff] %vm15, 0.0
  $region13: #{tpu_custom_call.1} parent=0 // pred_fallthru
    _
  %v19 = vld [vmem:[%s0] sm:$0xff]
  %v20 = vld [vmem:[%s1] sm:$0xff]
  %v21 = vlaneseq
  %v22 = vand.u32 %v21, 127
  %s23 = smul.u32 0, 128
  %v24 = vstv %s23
  %v25 = vadd.s32 %v22, %v24
  %v26 = vld [vmem:[#allocation4] sm:$0xff]
  %27 = vset.pattern.permute.xlu0 0
  %28 = vperm.xlu0 %27, %v20
  %v29 = vpop.permute.xlu0 %28
  %vm30 = vcmp.eq.s32.totalorder %v25, %v29
  %v31 = vsel %vm30, %v19, 0.0
  %32 = vadd.xlane.f32.xlu0 %v31
  %v33 = vpop.xlane.xlu0 %32
  %v34 = vadd.f32 %v26, %v33
  %vm35 = vcmask 7168
  %36 = vst.msk [vmem:[#allocation4] sm:$0xff] %vm35, %v34
  %37 = vmax.xlane.f32.xlu0 %v19
  %v38 = vpop.xlane.xlu0 %37
  %v39 = vld [vmem:[#allocation2] sm:$0xff]
  %v40 = vmax.f32 %v39, %v38
  %v41 = vld [vmem:[#allocation3] sm:$0xff]
  %v42 = vsub.f32 %v39, %v40
  %v43 = vmul.f32 %v42, 1.442695
  %v44 = vpow.pop %v43
  %v45 = vmul.f32 %v41, %v44
  %47 = vset.pattern.permute.xlu0 0
  %48 = vperm.xlu0 %47, %v40
  %v49 = vpop.permute.xlu0 %48
  %v51 = vsub.f32 %v19, %v49
  %v52 = vmul.f32 %v51, 1.442695
  %v53 = vpow.pop %v52
  %54 = vadd.xlane.f32.xlu0 %v53
  %v55 = vpop.xlane.xlu0 %54
  %v56 = vadd.f32 %v45, %v55
  %57 = vst.msk [vmem:[#allocation3] sm:$0xff] %vm35, %v56
  %58 = vst.msk [vmem:[#allocation2] sm:$0xff] %vm35, %v40
  // Predicated region
  $region14: #{tpu_custom_call.1} parent=0 // pred_check
    %p59 = pneg %p11
  $region15: #{tpu_custom_call.1} parent=0 // pred_check_branch
    %61 = sbr.rel (%p59) target = $region17
  $region16: #{tpu_custom_call.1} parent=0 // pred_region
    %v62 = vld [vmem:[#allocation2] sm:$0xff]
    %v63 = vld [vmem:[#allocation3] sm:$0xff]
    %v64 = vlog2.pop %v63
    %v65 = vmul.f32 %v64, 0.6931472
    %v66 = vadd.f32 %v62, %v65
    %v67 = vld [vmem:[#allocation4] sm:$0xff]
    %v68 = vsub.f32 %v66, %v67
    %69 = vst.msk [vmem:[%s2] sm:$0xff] %vm35, %v68
  $region17: #{tpu_custom_call.1} parent=0 // pred_fallthru
    _
  // Predicated region
  $region18: #{tpu_custom_call.1} parent=0 // pred_check
    _
  $region19: #{tpu_custom_call.1} parent=0 // pred_check_branch
    %71 = sbr.rel (0) target = $region21
  $region20: #{tpu_custom_call.1} parent=0 // pred_region
    _
  $region21: #{tpu_custom_call.1} parent=0 // pred_fallthru
    _
  // Predicated region
  $region22: #{tpu_custom_call.1} parent=0 // pred_check
    _
  $region23: #{tpu_custom_call.1} parent=0 // pred_check_branch
    %73 = sbr.rel (0) target = $region25
  $region24: #{tpu_custom_call.1} parent=0 // pred_region
    _
  $region25: #{tpu_custom_call.1} parent=0 // pred_fallthru
    _

</llo_original>
